<compile_context>
chip_gen: v6e
topology: v6e:2x2x1
jax: 0.10.0
libtpu: 0.0.40
codegen_flags: <defaults>
</compile_context>

<pallas_src>
import functools
import math
import numbers

import jax
import jax.numpy as jnp
from jax.experimental import pallas as pl
from jax.experimental.pallas import tpu as pltpu


def _contrastive_kernel(*refs, margin, scale, eps, alpha_static, acc_w, bf16_sub):
    """Grid = (batch tiles ["parallel"], feature-reduction tiles ["arbitrary"])."""
    if alpha_static is None:
        alpha_ref, out1_ref, vecs_ref, feat1_ref, label_ref, loss_ref, acc_ref = refs
    else:
        out1_ref, vecs_ref, feat1_ref, label_ref, loss_ref, acc_ref = refs

    K = vecs_ref.shape[0]
    d_idx = pl.program_id(1)

    # --- init accumulators on the first feature step --------------------------
    @pl.when(d_idx == 0)
    def _():
        acc_ref[...] = jnp.zeros_like(acc_ref)

    if bf16_sub:
        # v6e/v7x bf16-native VALU: subtract packed 2 elems/lane, upcast after.
        x = out1_ref[...]
    else:
        # eps folded once into x (instead of per-k adds).
        x = out1_ref[...].astype(jnp.float32) + jnp.float32(eps)

    def accum(k, other):
        if bf16_sub:
            diff = (x - other).astype(jnp.float32) + jnp.float32(eps)
        else:
            diff = x - other.astype(jnp.float32)
        dsq = diff * diff
        if acc_w == 1:
            # fallback when tile_d is not a multiple of 128
            acc_ref[k] = acc_ref[k] + jnp.sum(dsq, axis=-1, keepdims=True)
        else:
            # lane-blocked partial reduce: full-vreg VALU adds only; the
            # cross-lane (XLU) reduce is deferred to the epilogue.
            td = dsq.shape[-1]
            part = dsq[:, 0:acc_w]
            for s in range(1, td // acc_w):              # static unroll
                part = part + dsq[:, s * acc_w:(s + 1) * acc_w]
            acc_ref[k] = acc_ref[k] + part

    for k in range(K):                                    # static unroll over anchors
        accum(k, vecs_ref[k])
    accum(K, feat1_ref[...])

    # --- epilogue on the last feature step ------------------------------------
    @pl.when(d_idx == pl.num_programs(1) - 1)
    def _():
        if alpha_static is None:
            alpha = alpha_ref[0]
        else:
            alpha = jnp.float32(alpha_static)

        def rowsum(k):
            if acc_w == 1:
                return acc_ref[k]                         # already (TB, 1)
            return jnp.sum(acc_ref[k], axis=-1, keepdims=True)

        # raw (unscaled) distance sum; 1/sqrt(D) and 1/v are folded into `scale`
        dist_raw = alpha * jnp.sqrt(rowsum(K))
        for k in range(K):
            dist_raw = dist_raw + jnp.sqrt(rowsum(k))
        dist = dist_raw * jnp.float32(scale)

        marg = (jnp.float32(K) + alpha) * jnp.float32(margin)
        label = label_ref[...].astype(jnp.float32)        # (TB, 1)
        pos = (1.0 - label) * dist * dist * 0.5
        neg = label * jnp.square(jnp.maximum(0.0, marg - dist)) * 0.5
        loss_ref[...] = pos + neg


def _hw_info():
    """(physical per-core VMEM bytes, has-2-tensorcores, bf16-native VALU)."""
    phys_vmem = 128 * 1024 * 1024
    try:
        info = pltpu.get_tpu_info()
        cap = getattr(info, "vmem_capacity_bytes", None)
        if cap:
            phys_vmem = int(cap)
    except Exception:
        pass
    kind = ""
    try:
        kind = jax.devices()[0].device_kind.lower()
    except Exception:
        pass
    is_v7 = ("v7" in kind) or ("7x" in kind)
    if is_v7:
        phys_vmem = min(phys_vmem, 64 * 1024 * 1024)      # 64 MiB per TC on v7x
    two_tc = is_v7 or phys_vmem <= 64 * 1024 * 1024
    bf16_valu = ("v6" in kind) or is_v7                   # v5e has no bf16 VALU
    return phys_vmem, two_tc, bf16_valu


def _pick_tiles(B, D, K, itemsize, tile_budget, want_split_batch):
    """Largest (tile_b, tile_d) divisor pair whose double-buffered footprint fits."""
    cap_b = B
    if want_split_batch and B >= 16:
        cap_b = max(8, B // 2)        # keep >=2 batch tiles so both v7x TCs get work
    b_cands = [t for t in range(1, B + 1)
               if B % t == 0 and t <= cap_b and (t % 8 == 0 or t == B)]
    if not b_cands:                   # no valid capped divisor -> drop the cap
        b_cands = [t for t in range(1, B + 1)
                   if B % t == 0 and (t % 8 == 0 or t == B)]
    d_cands = [t for t in range(1, D + 1)
               if D % t == 0 and (t % 128 == 0 or t == D)]

    def footprint(tb, td):
        main = 2 * (K + 2) * tb * td * itemsize           # double-buffered out1/vectors/feat1
        small = 4 * tb * 128 * 4                          # label + loss windows (lane padded)
        acc = (K + 1) * tb * 128 * 4                      # accumulator scratch
        return main + small + acc

    best = None
    for tb in b_cands:
        for td in d_cands:
            if footprint(tb, td) > tile_budget:
                continue
            key = (tb * td, td, tb)
            if best is None or key > best[0]:
                best = (key, tb, td)
    if best is None:                                      # nothing fits -> minimal valid tile
        return min(b_cands), min(d_cands)
    return best[1], best[2]


def contrastive_loss(output1, vectors, feat1, label, alpha,
                     *, margin=0.1, v=0.0, tile_b=None, tile_d=None):
    """output1: (B, D), vectors: (K, B, D), feat1: (B, D), label: (B,), alpha: scalar.

    Inputs are NOT cast in the wrapper: bf16 activations stay bf16 across the
    HBM boundary and are upcast on-chip.
    """
    output1 = jnp.asarray(output1)
    vectors = jnp.asarray(vectors)
    feat1 = jnp.asarray(feat1)
    B, D = output1.shape
    K = vectors.shape[0]

    phys_vmem, two_tc, bf16_valu = _hw_info()
    # ~75% of physical VMEM -> ~48 MiB on v7x, ~96 MiB on v5e/v6e.
    vmem_limit = max(32 * 1024 * 1024, (phys_vmem * 3) // 4)
    tile_budget = (vmem_limit * 4) // 5                   # headroom for compiler scratch

    itemsize = max(output1.dtype.itemsize, vectors.dtype.itemsize, feat1.dtype.itemsize)
    auto_tb, auto_td = _pick_tiles(B, D, K, itemsize, tile_budget,
                                   want_split_batch=two_tc)
    if tile_b is None:
        tile_b = auto_tb
    if tile_d is None:
        tile_d = auto_td
    assert B % tile_b == 0 and D % tile_d == 0, (B, D, tile_b, tile_d)
    grid = (B // tile_b, D // tile_d)

    acc_w = 128 if tile_d % 128 == 0 else 1
    bf16_sub = (bf16_valu
                and output1.dtype == jnp.bfloat16
                and vectors.dtype == jnp.bfloat16
                and feat1.dtype == jnp.bfloat16)

    # alpha: fold statically when it is a trace-time Python scalar; otherwise
    # scalar-prefetch it into SMEM.
    alpha_static = None
    if isinstance(alpha, numbers.Real) and not isinstance(alpha, bool):
        alpha_static = float(alpha)

    label2d = jnp.asarray(label, dtype=jnp.float32).reshape(B, 1)
    # Fold 1/sqrt(D) (pairwise_distance normalization) and optional 1/v into
    # one static scale applied once in the epilogue.
    scale = (1.0 / math.sqrt(float(D))) * ((1.0 / float(v)) if v > 0.0 else 1.0)

    kernel = functools.partial(
        _contrastive_kernel, margin=float(margin), scale=float(scale),
        eps=1e-6, alpha_static=alpha_static, acc_w=acc_w, bf16_sub=bf16_sub)

    in_specs = [
        pl.BlockSpec((tile_b, tile_d), lambda b, d, *_: (b, d)),        # output1
        pl.BlockSpec((K, tile_b, tile_d), lambda b, d, *_: (0, b, d)),  # vectors
        pl.BlockSpec((tile_b, tile_d), lambda b, d, *_: (b, d)),        # feat1
        pl.BlockSpec((tile_b, 1), lambda b, d, *_: (b, 0)),             # label
    ]
    # Same output block across the reduction axis -> stays VMEM-resident.
    # TODO(synk): lane width 1 -> masked store; negligible vs. read bytes.
    out_spec = pl.BlockSpec((tile_b, 1), lambda b, d, *_: (b, 0))
    scratch = [pltpu.VMEM((K + 1, tile_b, acc_w), jnp.float32)]

    if alpha_static is None:
        num_prefetch = 1
        call_args = (jnp.asarray(alpha, jnp.float32).reshape(1),
                     output1, vectors, feat1, label2d)
    else:
        num_prefetch = 0
        call_args = (output1, vectors, feat1, label2d)

    loss = pl.pallas_call(
        kernel,
        out_shape=jax.ShapeDtypeStruct((B, 1), jnp.float32),
        grid_spec=pltpu.PrefetchScalarGridSpec(
            num_scalar_prefetch=num_prefetch,
            grid=grid,
            in_specs=in_specs,
            out_specs=out_spec,
            scratch_shapes=scratch),
        compiler_params=pltpu.CompilerParams(
            dimension_semantics=("parallel", "arbitrary"),
            vmem_limit_bytes=int(vmem_limit)),
    )(*call_args)

    return loss[:, 0]                                     # (B,)


def _reference(output1, vectors, feat1, label, alpha, margin=0.1, v=0.0):
    D = output1.shape[1]
    eps = 1e-6
    d = jnp.zeros((output1.shape[0],), jnp.float32)
    for k in range(vectors.shape[0]):
        d = d + jnp.linalg.norm(output1 - vectors[k] + eps, axis=-1) / jnp.sqrt(D * 1.0)
    d = d + alpha * jnp.linalg.norm(output1 - feat1 + eps, axis=-1) / jnp.sqrt(D * 1.0)
    marg = (vectors.shape[0] + alpha) * margin
    if v > 0.0:
        d = d / v
    return (1 - label) * d ** 2 * 0.5 + label * jnp.maximum(0.0, marg - d) ** 2 * 0.5


if __name__ == "__main__":
    key = jax.random.PRNGKey(0)
    k1, k2, k3, k4 = jax.random.split(key, 4)

    B, D, K = 16, 256, 3
    output1 = jax.random.normal(k1, (B, D), jnp.float32)
    vectors = jax.random.normal(k2, (K, B, D), jnp.float32)
    feat1 = jax.random.normal(k3, (B, D), jnp.float32)
    label = (jax.random.uniform(k4, (B,)) > 0.5).astype(jnp.float32)
    alpha = 0.5

    # 1) default (budget-aware) tiling, v == 0 path, static alpha fold
    loss = contrastive_loss(output1, vectors, feat1, label, alpha,
                            margin=0.1, v=0.0)
    jax.block_until_ready(loss)
    ref = _reference(output1, vectors, feat1, label, alpha, margin=0.1, v=0.0)
    assert loss.shape == (B,)
    assert jnp.allclose(loss, ref, atol=1e-4, rtol=1e-4), (loss, ref)

    # 2) small tiles -> exercises the 2x2 (batch x feature-reduction) grid and
    #    the v > 0 static branch (scale folding).
    loss2 = contrastive_loss(output1, vectors, feat1, label, alpha,
                             margin=0.1, v=2.0, tile_b=8, tile_d=128)
    jax.block_until_ready(loss2)
    ref2 = _reference(output1, vectors, feat1, label, alpha, margin=0.1, v=2.0)
    assert jnp.allclose(loss2, ref2, atol=1e-4, rtol=1e-4), (loss2, ref2)

    # 3) bf16 activations pass straight through HBM (half the DMA bytes);
    #    bf16-native subtract on v6e/v7x, f32-upcast path on v5e.
    loss3 = contrastive_loss(output1.astype(jnp.bfloat16),
                             vectors.astype(jnp.bfloat16),
                             feat1.astype(jnp.bfloat16),
                             label, alpha, margin=0.1, v=0.0)
    jax.block_until_ready(loss3)
    assert jnp.allclose(loss3, ref, atol=5e-2, rtol=5e-2), (loss3, ref)

    # 4) traced alpha -> exercises the SMEM scalar-prefetch path.
    loss4 = contrastive_loss(output1, vectors, feat1, label,
                             jnp.float32(alpha), margin=0.1, v=0.0)
    jax.block_until_ready(loss4)
    assert jnp.allclose(loss4, ref, atol=1e-4, rtol=1e-4), (loss4, ref)

    print("KERNEL_OK")
</pallas_src>

<mosaic_0001>
module attributes {stable_mosaic.version = 11 : i64} {
  func.func @_contrastive_kernel(%arg0: i32, %arg1: i32, %arg2: memref<16x256xf32, #tpu.memory_space<vmem>>, %arg3: memref<3x16x256xf32, #tpu.memory_space<vmem>>, %arg4: memref<16x256xf32, #tpu.memory_space<vmem>>, %arg5: memref<16x1xf32, #tpu.memory_space<vmem>>, %arg6: memref<16x1xf32, #tpu.memory_space<vmem>>, %arg7: memref<4x16x128xf32, #tpu.memory_space<vmem>>) attributes {dimension_semantics = [#tpu.dimension_semantics<parallel>, #tpu.dimension_semantics<arbitrary>], iteration_bounds = array<i64: 1, 1>, scalar_prefetch = 0 : i64, scratch_operands = 1 : i64, tpu.core_type = #tpu.core_type<tc>, window_params = [{transform_indices = @transform_0, window_bounds = array<i64: 16, 256>}, {transform_indices = @transform_1, window_bounds = array<i64: 3, 16, 256>}, {transform_indices = @transform_2, window_bounds = array<i64: 16, 256>}, {transform_indices = @transform_3, window_bounds = array<i64: 16, 1>}, {transform_indices = @transform_4, window_bounds = array<i64: 16, 1>}]} {
    %c0_i32 = arith.constant 0 : i32
    %0 = arith.cmpi eq, %arg1, %c0_i32 : i32
    %1 = arith.extui %0 : i1 to i32
    %c0_i32_0 = arith.constant 0 : i32
    %2 = arith.cmpi ne, %1, %c0_i32_0 : i32
    scf.if %2 {
      %cst_36 = arith.constant 0.000000e+00 : f32
      %60 = vector.broadcast %cst_36 : f32 to vector<4x16x128xf32>
      %c0_37 = arith.constant 0 : index
      %c0_38 = arith.constant 0 : index
      %c0_39 = arith.constant 0 : index
      %61 = vector.load %arg7[%c0_37, %c0_38, %c0_39] : memref<4x16x128xf32, #tpu.memory_space<vmem>>, vector<4x16x128xf32>
      tpu.vector_store %arg7[%c0_37, %c0_38, %c0_39], %60 {strides = array<i32>} : memref<4x16x128xf32, #tpu.memory_space<vmem>>, vector<4x16x128xf32>,
    } else {
    }
    %c0 = arith.constant 0 : index
    %c0_1 = arith.constant 0 : index
    %3 = vector.load %arg2[%c0, %c0_1] : memref<16x256xf32, #tpu.memory_space<vmem>>, vector<16x256xf32>
    %cst = arith.constant 9.99999997E-7 : f32
    %4 = vector.broadcast %cst : f32 to vector<16x256xf32>
    %5 = arith.addf %3, %4 : vector<16x256xf32>
    %c0_2 = arith.constant 0 : index
    %c0_3 = arith.constant 0 : index
    %c0_4 = arith.constant 0 : index
    %6 = vector.load %arg3[%c0_2, %c0_3, %c0_4] : memref<3x16x256xf32, #tpu.memory_space<vmem>>, vector<1x16x256xf32>
    %7 = vector.shape_cast %6 : vector<1x16x256xf32> to vector<16x256xf32>
    %8 = arith.subf %5, %7 : vector<16x256xf32>
    %9 = arith.mulf %8, %8 : vector<16x256xf32>
    %10 = vector.extract_strided_slice %9 {offsets = [0, 0], sizes = [16, 128], strides = [1, 1]} : vector<16x256xf32> to vector<16x128xf32>
    %11 = vector.extract_strided_slice %9 {offsets = [0, 128], sizes = [16, 128], strides = [1, 1]} : vector<16x256xf32> to vector<16x128xf32>
    %12 = arith.addf %10, %11 : vector<16x128xf32>
    %c0_5 = arith.constant 0 : index
    %c0_6 = arith.constant 0 : index
    %c0_7 = arith.constant 0 : index
    %13 = vector.load %arg7[%c0_5, %c0_6, %c0_7] : memref<4x16x128xf32, #tpu.memory_space<vmem>>, vector<1x16x128xf32>
    %14 = vector.shape_cast %13 : vector<1x16x128xf32> to vector<16x128xf32>
    %15 = arith.addf %14, %12 : vector<16x128xf32>
    %c0_8 = arith.constant 0 : index
    %c0_9 = arith.constant 0 : index
    %c0_10 = arith.constant 0 : index
    %16 = vector.load %arg7[%c0_8, %c0_9, %c0_10] : memref<4x16x128xf32, #tpu.memory_space<vmem>>, vector<1x16x128xf32>
    %17 = vector.shape_cast %16 : vector<1x16x128xf32> to vector<16x128xf32>
    %18 = vector.shape_cast %15 : vector<16x128xf32> to vector<1x16x128xf32>
    tpu.vector_store %arg7[%c0_8, %c0_9, %c0_10], %18 {strides = array<i32>} : memref<4x16x128xf32, #tpu.memory_space<vmem>>, vector<1x16x128xf32>,
    %c1 = arith.constant 1 : index
    %c0_11 = arith.constant 0 : index
    %c0_12 = arith.constant 0 : index
    %19 = vector.load %arg3[%c1, %c0_11, %c0_12] : memref<3x16x256xf32, #tpu.memory_space<vmem>>, vector<1x16x256xf32>
    %20 = vector.shape_cast %19 : vector<1x16x256xf32> to vector<16x256xf32>
    %21 = arith.subf %5, %20 : vector<16x256xf32>
    %22 = arith.mulf %21, %21 : vector<16x256xf32>
    %23 = vector.extract_strided_slice %22 {offsets = [0, 0], sizes = [16, 128], strides = [1, 1]} : vector<16x256xf32> to vector<16x128xf32>
    %24 = vector.extract_strided_slice %22 {offsets = [0, 128], sizes = [16, 128], strides = [1, 1]} : vector<16x256xf32> to vector<16x128xf32>
    %25 = arith.addf %23, %24 : vector<16x128xf32>
    %c1_13 = arith.constant 1 : index
    %c0_14 = arith.constant 0 : index
    %c0_15 = arith.constant 0 : index
    %26 = vector.load %arg7[%c1_13, %c0_14, %c0_15] : memref<4x16x128xf32, #tpu.memory_space<vmem>>, vector<1x16x128xf32>
    %27 = vector.shape_cast %26 : vector<1x16x128xf32> to vector<16x128xf32>
    %28 = arith.addf %27, %25 : vector<16x128xf32>
    %c1_16 = arith.constant 1 : index
    %c0_17 = arith.constant 0 : index
    %c0_18 = arith.constant 0 : index
    %29 = vector.load %arg7[%c1_16, %c0_17, %c0_18] : memref<4x16x128xf32, #tpu.memory_space<vmem>>, vector<1x16x128xf32>
    %30 = vector.shape_cast %29 : vector<1x16x128xf32> to vector<16x128xf32>
    %31 = vector.shape_cast %28 : vector<16x128xf32> to vector<1x16x128xf32>
    tpu.vector_store %arg7[%c1_16, %c0_17, %c0_18], %31 {strides = array<i32>} : memref<4x16x128xf32, #tpu.memory_space<vmem>>, vector<1x16x128xf32>,
    %c2 = arith.constant 2 : index
    %c0_19 = arith.constant 0 : index
    %c0_20 = arith.constant 0 : index
    %32 = vector.load %arg3[%c2, %c0_19, %c0_20] : memref<3x16x256xf32, #tpu.memory_space<vmem>>, vector<1x16x256xf32>
    %33 = vector.shape_cast %32 : vector<1x16x256xf32> to vector<16x256xf32>
    %34 = arith.subf %5, %33 : vector<16x256xf32>
    %35 = arith.mulf %34, %34 : vector<16x256xf32>
    %36 = vector.extract_strided_slice %35 {offsets = [0, 0], sizes = [16, 128], strides = [1, 1]} : vector<16x256xf32> to vector<16x128xf32>
    %37 = vector.extract_strided_slice %35 {offsets = [0, 128], sizes = [16, 128], strides = [1, 1]} : vector<16x256xf32> to vector<16x128xf32>
    %38 = arith.addf %36, %37 : vector<16x128xf32>
    %c2_21 = arith.constant 2 : index
    %c0_22 = arith.constant 0 : index
    %c0_23 = arith.constant 0 : index
    %39 = vector.load %arg7[%c2_21, %c0_22, %c0_23] : memref<4x16x128xf32, #tpu.memory_space<vmem>>, vector<1x16x128xf32>
    %40 = vector.shape_cast %39 : vector<1x16x128xf32> to vector<16x128xf32>
    %41 = arith.addf %40, %38 : vector<16x128xf32>
    %c2_24 = arith.constant 2 : index
    %c0_25 = arith.constant 0 : index
    %c0_26 = arith.constant 0 : index
    %42 = vector.load %arg7[%c2_24, %c0_25, %c0_26] : memref<4x16x128xf32, #tpu.memory_space<vmem>>, vector<1x16x128xf32>
    %43 = vector.shape_cast %42 : vector<1x16x128xf32> to vector<16x128xf32>
    %44 = vector.shape_cast %41 : vector<16x128xf32> to vector<1x16x128xf32>
    tpu.vector_store %arg7[%c2_24, %c0_25, %c0_26], %44 {strides = array<i32>} : memref<4x16x128xf32, #tpu.memory_space<vmem>>, vector<1x16x128xf32>,
    %c0_27 = arith.constant 0 : index
    %c0_28 = arith.constant 0 : index
    %45 = vector.load %arg4[%c0_27, %c0_28] : memref<16x256xf32, #tpu.memory_space<vmem>>, vector<16x256xf32>
    %46 = arith.subf %5, %45 : vector<16x256xf32>
    %47 = arith.mulf %46, %46 : vector<16x256xf32>
    %48 = vector.extract_strided_slice %47 {offsets = [0, 0], sizes = [16, 128], strides = [1, 1]} : vector<16x256xf32> to vector<16x128xf32>
    %49 = vector.extract_strided_slice %47 {offsets = [0, 128], sizes = [16, 128], strides = [1, 1]} : vector<16x256xf32> to vector<16x128xf32>
    %50 = arith.addf %48, %49 : vector<16x128xf32>
    %c3 = arith.constant 3 : index
    %c0_29 = arith.constant 0 : index
    %c0_30 = arith.constant 0 : index
    %51 = vector.load %arg7[%c3, %c0_29, %c0_30] : memref<4x16x128xf32, #tpu.memory_space<vmem>>, vector<1x16x128xf32>
    %52 = vector.shape_cast %51 : vector<1x16x128xf32> to vector<16x128xf32>
    %53 = arith.addf %52, %50 : vector<16x128xf32>
    %c3_31 = arith.constant 3 : index
    %c0_32 = arith.constant 0 : index
    %c0_33 = arith.constant 0 : index
    %54 = vector.load %arg7[%c3_31, %c0_32, %c0_33] : memref<4x16x128xf32, #tpu.memory_space<vmem>>, vector<1x16x128xf32>
    %55 = vector.shape_cast %54 : vector<1x16x128xf32> to vector<16x128xf32>
    %56 = vector.shape_cast %53 : vector<16x128xf32> to vector<1x16x128xf32>
    tpu.vector_store %arg7[%c3_31, %c0_32, %c0_33], %56 {strides = array<i32>} : memref<4x16x128xf32, #tpu.memory_space<vmem>>, vector<1x16x128xf32>,
    %c0_i32_34 = arith.constant 0 : i32
    %57 = arith.cmpi eq, %arg1, %c0_i32_34 : i32
    %58 = arith.extui %57 : i1 to i32
    %c0_i32_35 = arith.constant 0 : i32
    %59 = arith.cmpi ne, %58, %c0_i32_35 : i32
    scf.if %59 {
      %c3_36 = arith.constant 3 : index
      %c0_37 = arith.constant 0 : index
      %c0_38 = arith.constant 0 : index
      %60 = vector.load %arg7[%c3_36, %c0_37, %c0_38] : memref<4x16x128xf32, #tpu.memory_space<vmem>>, vector<1x16x128xf32>
      %61 = vector.shape_cast %60 : vector<1x16x128xf32> to vector<16x128xf32>
      %cst_39 = arith.constant dense<0.000000e+00> : vector<16xf32>
      %62 = vector.multi_reduction <add>, %61, %cst_39 [1] : vector<16x128xf32> to vector<16xf32>
      %63 = vector.shape_cast %62 : vector<16xf32> to vector<16x1xf32>
      %64 = math.sqrt %63 : vector<16x1xf32>
      %cst_40 = arith.constant 5.000000e-01 : f32
      %65 = vector.broadcast %cst_40 : f32 to vector<16x1xf32>
      %66 = arith.mulf %65, %64 : vector<16x1xf32>
      %c0_41 = arith.constant 0 : index
      %c0_42 = arith.constant 0 : index
      %c0_43 = arith.constant 0 : index
      %67 = vector.load %arg7[%c0_41, %c0_42, %c0_43] : memref<4x16x128xf32, #tpu.memory_space<vmem>>, vector<1x16x128xf32>
      %68 = vector.shape_cast %67 : vector<1x16x128xf32> to vector<16x128xf32>
      %cst_44 = arith.constant dense<0.000000e+00> : vector<16xf32>
      %69 = vector.multi_reduction <add>, %68, %cst_44 [1] : vector<16x128xf32> to vector<16xf32>
      %70 = vector.shape_cast %69 : vector<16xf32> to vector<16x1xf32>
      %71 = math.sqrt %70 : vector<16x1xf32>
      %72 = arith.addf %66, %71 : vector<16x1xf32>
      %c1_45 = arith.constant 1 : index
      %c0_46 = arith.constant 0 : index
      %c0_47 = arith.constant 0 : index
      %73 = vector.load %arg7[%c1_45, %c0_46, %c0_47] : memref<4x16x128xf32, #tpu.memory_space<vmem>>, vector<1x16x128xf32>
      %74 = vector.shape_cast %73 : vector<1x16x128xf32> to vector<16x128xf32>
      %cst_48 = arith.constant dense<0.000000e+00> : vector<16xf32>
      %75 = vector.multi_reduction <add>, %74, %cst_48 [1] : vector<16x128xf32> to vector<16xf32>
      %76 = vector.shape_cast %75 : vector<16xf32> to vector<16x1xf32>
      %77 = math.sqrt %76 : vector<16x1xf32>
      %78 = arith.addf %72, %77 : vector<16x1xf32>
      %c2_49 = arith.constant 2 : index
      %c0_50 = arith.constant 0 : index
      %c0_51 = arith.constant 0 : index
      %79 = vector.load %arg7[%c2_49, %c0_50, %c0_51] : memref<4x16x128xf32, #tpu.memory_space<vmem>>, vector<1x16x128xf32>
      %80 = vector.shape_cast %79 : vector<1x16x128xf32> to vector<16x128xf32>
      %cst_52 = arith.constant dense<0.000000e+00> : vector<16xf32>
      %81 = vector.multi_reduction <add>, %80, %cst_52 [1] : vector<16x128xf32> to vector<16xf32>
      %82 = vector.shape_cast %81 : vector<16xf32> to vector<16x1xf32>
      %83 = math.sqrt %82 : vector<16x1xf32>
      %84 = arith.addf %78, %83 : vector<16x1xf32>
      %cst_53 = arith.constant 6.250000e-02 : f32
      %85 = vector.broadcast %cst_53 : f32 to vector<16x1xf32>
      %86 = arith.mulf %84, %85 : vector<16x1xf32>
      %cst_54 = arith.constant 3.000000e+00 : f32
      %cst_55 = arith.constant 5.000000e-01 : f32
      %87 = arith.addf %cst_54, %cst_55 : f32
      %cst_56 = arith.constant 1.000000e-01 : f32
      %88 = arith.mulf %87, %cst_56 : f32
      %c0_57 = arith.constant 0 : index
      %c0_58 = arith.constant 0 : index
      %89 = vector.load %arg5[%c0_57, %c0_58] : memref<16x1xf32, #tpu.memory_space<vmem>>, vector<16x1xf32>
      %cst_59 = arith.constant 1.000000e+00 : f32
      %90 = vector.broadcast %cst_59 : f32 to vector<16x1xf32>
      %91 = arith.subf %90, %89 : vector<16x1xf32>
      %92 = arith.mulf %91, %86 : vector<16x1xf32>
      %93 = arith.mulf %92, %86 : vector<16x1xf32>
      %cst_60 = arith.constant 5.000000e-01 : f32
      %94 = vector.broadcast %cst_60 : f32 to vector<16x1xf32>
      %95 = arith.mulf %93, %94 : vector<16x1xf32>
      %96 = vector.broadcast %88 : f32 to vector<16x1xf32>
      %97 = arith.subf %96, %86 : vector<16x1xf32>
      %cst_61 = arith.constant 0.000000e+00 : f32
      %98 = vector.broadcast %cst_61 : f32 to vector<16x1xf32>
      %99 = arith.maximumf %98, %97 : vector<16x1xf32>
      %100 = arith.mulf %99, %99 : vector<16x1xf32>
      %101 = arith.mulf %89, %100 : vector<16x1xf32>
      %cst_62 = arith.constant 5.000000e-01 : f32
      %102 = vector.broadcast %cst_62 : f32 to vector<16x1xf32>
      %103 = arith.mulf %101, %102 : vector<16x1xf32>
      %104 = arith.addf %95, %103 : vector<16x1xf32>
      %c0_63 = arith.constant 0 : index
      %c0_64 = arith.constant 0 : index
      %105 = vector.load %arg6[%c0_63, %c0_64] : memref<16x1xf32, #tpu.memory_space<vmem>>, vector<16x1xf32>
      tpu.vector_store %arg6[%c0_63, %c0_64], %104 {strides = array<i32>} : memref<16x1xf32, #tpu.memory_space<vmem>>, vector<16x1xf32>,
    } else {
    }
    return
  }
  func.func @transform_0(%arg0: i32, %arg1: i32) -> (i32, i32) {
    %c0_i32 = arith.constant 0 : i32
    return %arg0, %arg1 : i32, i32
  }
  func.func @transform_1(%arg0: i32, %arg1: i32) -> (i32, i32, i32) {
    %c0_i32 = arith.constant 0 : i32
    %c0_i32_0 = arith.constant 0 : i32
    return %c0_i32, %arg0, %arg1 : i32, i32, i32
  }
  func.func @transform_2(%arg0: i32, %arg1: i32) -> (i32, i32) {
    %c0_i32 = arith.constant 0 : i32
    return %arg0, %arg1 : i32, i32
  }
  func.func @transform_3(%arg0: i32, %arg1: i32) -> (i32, i32) {
    %c0_i32 = arith.constant 0 : i32
    %c0_i32_0 = arith.constant 0 : i32
    return %arg0, %c0_i32 : i32, i32
  }
  func.func @transform_4(%arg0: i32, %arg1: i32) -> (i32, i32) {
    %c0_i32 = arith.constant 0 : i32
    %c0_i32_0 = arith.constant 0 : i32
    return %arg0, %c0_i32 : i32, i32
  }
}

</mosaic_0001>

<llo_original>
// kernel: tpu_custom_call.1
$region0: #{tpu_custom_call.1}
  #allocation0 [shape = 'u32[]', space=smem, size = 0x4, offset = 0x4, fixed_abs, tag = 'smem constant byte address 0x4 - core index']
  #allocation1 [shape = 'u32[144,128]{1,0:T(1,128)}', space=vmem, size = 0x12000, scoped, tag = 'internal scratch']
  #allocation2 [shape = 'f32[4,16,128]{2,1,0:T(8,128)}', space=vmem, size = 0x8000, scoped, tag = 'scratch operand']
  %s0 = inlined_call_operand.hbm [shape: f32[16,256], index: 0, kind: input, shape index: {}]
  %s1 = inlined_call_operand.hbm [shape: f32[3,16,256], index: 1, kind: input, shape index: {}]
  %s2 = inlined_call_operand.hbm [shape: f32[16,256], index: 2, kind: input, shape index: {}]
  %s3 = inlined_call_operand.vmem [shape: f32[16,1], index: 3, kind: input, shape index: {}]
  %s4 = inlined_call_operand.vmem [shape: f32[16,1], index: 4, kind: output, shape index: {}]
  %s5 = sld [smem:[#allocation0]]
  $region46: #{tpu_custom_call.1} parent=0
    _
  %s7 = ssub.s32 1, %s5
  %s8 = scalar_select 0, %s7, %s5
  $region1: #{tpu_custom_call.1} parent=0
    #allocation3 [shape = 'u8[16384]{0}', space=vmem, size = 0x4000, scoped, tag = 'input window, operand 0, single buffered']
    #allocation4 [shape = 's32[1]{0}', space=sflag, size = 0x4, scoped, tag = 'scoped memory for tpu_custom_call.1']
    #allocation5 [shape = 'u8[49152]{0}', space=vmem, size = 0xc000, scoped, tag = 'input window, operand 1, single buffered']
    #allocation6 [shape = 's32[1]{0}', space=sflag, size = 0x4, scoped, tag = 'scoped memory for tpu_custom_call.1']
    #allocation7 [shape = 'u8[16384]{0}', space=vmem, size = 0x4000, scoped, tag = 'input window, operand 2, single buffered']
    %9 = vsyncpa [#allocation4], 0
    %10 = vsyncpa [#allocation6], 0
    // Predicated region
    $region2: #{tpu_custom_call.1} parent=1 // pred_check
      _
    $region3: #{tpu_custom_call.1} parent=1 // pred_check_branch
      %12 = sbr.rel (0) target = $region5
    $region4: #{tpu_custom_call.1} parent=1 // pred_region
      %s14 = ssub.s32 512, 512
      %15 = vsyncadd [#allocation4], %s14
      %s16 = sshll.u32 [#allocation3], 4
      %s17 = int_to_ptr.vmem [resolvable:$true] %s16
      %22 = dma.hbm_to_vmem [thread:$0]  %s0, 512, %s17, [#allocation4], 256, 256, 16
    $region5: #{tpu_custom_call.1} parent=1 // pred_fallthru
      _
    // Predicated region
    $region6: #{tpu_custom_call.1} parent=1 // pred_check
      _
    $region7: #{tpu_custom_call.1} parent=1 // pred_check_branch
      %24 = sbr.rel (0) target = $region9
    $region8: #{tpu_custom_call.1} parent=1 // pred_region
      %s26 = ssub.s32 1536, 1536
      %27 = vsyncadd [#allocation6], %s26
      %s28 = sshll.u32 [#allocation5], 4
      %s29 = int_to_ptr.vmem [resolvable:$true] %s28
      %34 = dma.hbm_to_vmem [thread:$0]  %s1, 1536, %s29, [#allocation6], 256, 256, 16
    $region9: #{tpu_custom_call.1} parent=1 // pred_fallthru
      _
    // Predicated region
    $region10: #{tpu_custom_call.1} parent=1 // pred_check
      _
    $region11: #{tpu_custom_call.1} parent=1 // pred_check_branch
      %36 = sbr.rel (0) target = $region13
    $region12: #{tpu_custom_call.1} parent=1 // pred_region
      %s38 = ssub.s32 512, 512
      %39 = vsyncadd [#allocation6], %s38
      %s40 = sshll.u32 [#allocation7], 4
      %s41 = int_to_ptr.vmem [resolvable:$true] %s40
      %46 = dma.hbm_to_vmem [thread:$0]  %s2, 512, %s41, [#allocation6], 256, 256, 16
    $region13: #{tpu_custom_call.1} parent=1 // pred_fallthru
      _
    // Predicated region
    $region14: #{tpu_custom_call.1} parent=1 // pred_check
      _
    $region15: #{tpu_custom_call.1} parent=1 // pred_check_branch
      %48 = sbr.rel (0) target = $region17
    $region16: #{tpu_custom_call.1} parent=1 // pred_region
      _
    $region17: #{tpu_custom_call.1} parent=1 // pred_fallthru
      _
    // Predicated region
    $region18: #{tpu_custom_call.1} parent=1 // pred_check
      _
    $region19: #{tpu_custom_call.1} parent=1 // pred_check_branch
      %50 = sbr.rel (0) target = $region21
    $region20: #{tpu_custom_call.1} parent=1 // pred_region
      %51 = dma.done [#allocation4], 512
    $region21: #{tpu_custom_call.1} parent=1 // pred_fallthru
      _
    // Predicated region
    $region22: #{tpu_custom_call.1} parent=1 // pred_check
      _
    $region23: #{tpu_custom_call.1} parent=1 // pred_check_branch
      %53 = sbr.rel (0) target = $region25
    $region24: #{tpu_custom_call.1} parent=1 // pred_region
      %54 = dma.done [#allocation6], 1536
    $region25: #{tpu_custom_call.1} parent=1 // pred_fallthru
      _
    // Predicated region
    $region26: #{tpu_custom_call.1} parent=1 // pred_check
      _
    $region27: #{tpu_custom_call.1} parent=1 // pred_check_branch
      %56 = sbr.rel (0) target = $region29
    $region28: #{tpu_custom_call.1} parent=1 // pred_region
      %57 = dma.done [#allocation6], 512
    $region29: #{tpu_custom_call.1} parent=1 // pred_fallthru
      _
    %p58 = scmp.eq.s32.totalorder 0, 0
    // Predicated region
    $region30: #{tpu_custom_call.1} parent=1 // pred_check
      %p59 = pneg %p58
    $region31: #{tpu_custom_call.1} parent=1 // pred_check_branch
      %61 = sbr.rel (%p59) target = $region33
    $region32: #{tpu_custom_call.1} parent=1 // pred_region
      %62 = vst [vmem:[#allocation2] sm:$0xff] 0.0
      %63 = vst [vmem:[#allocation2 + $0x8] sm:$0xff] 0.0
      %64 = vst [vmem:[#allocation2 + $0x10] sm:$0xff] 0.0
      %65 = vst [vmem:[#allocation2 + $0x18] sm:$0xff] 0.0
      %66 = vst [vmem:[#allocation2 + $0x20] sm:$0xff] 0.0
      %67 = vst [vmem:[#allocation2 + $0x28] sm:$0xff] 0.0
      %68 = vst [vmem:[#allocation2 + $0x30] sm:$0xff] 0.0
      %69 = vst [vmem:[#allocation2 + $0x38] sm:$0xff] 0.0
    $region33: #{tpu_custom_call.1} parent=1 // pred_fallthru
      _
    %v70 = vld [vmem:[#allocation3] sm:$0xff]
    %v71 = vld [vmem:[#allocation3 + $0x8] sm:$0xff]
    %v72 = vld [vmem:[#allocation3 + $0x10] sm:$0xff]
    %v73 = vld [vmem:[#allocation3 + $0x18] sm:$0xff]
    %v74 = vadd.f32 %v70, 1e-06
    %v75 = vadd.f32 %v71, 1e-06
    %v76 = vadd.f32 %v72, 1e-06
    %v77 = vadd.f32 %v73, 1e-06
    %v78 = vld [vmem:[#allocation5] sm:$0xff]
    %v79 = vld [vmem:[#allocation5 + $0x8] sm:$0xff]
    %v80 = vld [vmem:[#allocation5 + $0x10] sm:$0xff]
    %v81 = vld [vmem:[#allocation5 + $0x18] sm:$0xff]
    %v82 = vsub.f32 %v74, %v78
    %v83 = vsub.f32 %v75, %v79
    %v84 = vsub.f32 %v76, %v80
    %v85 = vsub.f32 %v77, %v81
    %v86 = vmul.f32 %v82, %v82
    %v87 = vmul.f32 %v83, %v83
    %v88 = vmul.f32 %v84, %v84
    %v89 = vmul.f32 %v85, %v85
    %v90 = vadd.f32 %v86, %v87
    %v91 = vadd.f32 %v88, %v89
    %v92 = vld [vmem:[#allocation2] sm:$0xff]
    %v93 = vld [vmem:[#allocation2 + $0x8] sm:$0xff]
    %v94 = vadd.f32 %v92, %v90
    %v95 = vadd.f32 %v93, %v91
    %96 = vst [vmem:[#allocation2] sm:$0xff] %v94
    %97 = vst [vmem:[#allocation2 + $0x8] sm:$0xff] %v95
    %s98 = scalar_lea.vmem [#allocation5], 32
    %v99 = vld [vmem:[%s98] sm:$0xff]
    %v100 = vld [vmem:[%s98 + $0x8] sm:$0xff]
    %v101 = vld [vmem:[%s98 + $0x10] sm:$0xff]
    %v102 = vld [vmem:[%s98 + $0x18] sm:$0xff]
    %v103 = vsub.f32 %v74, %v99
    %v104 = vsub.f32 %v75, %v100
    %v105 = vsub.f32 %v76, %v101
    %v106 = vsub.f32 %v77, %v102
    %v107 = vmul.f32 %v103, %v103
    %v108 = vmul.f32 %v104, %v104
    %v109 = vmul.f32 %v105, %v105
    %v110 = vmul.f32 %v106, %v106
    %v111 = vadd.f32 %v107, %v108
    %v112 = vadd.f32 %v109, %v110
    %s113 = scalar_lea.vmem [#allocation2], 16
    %v114 = vld [vmem:[%s113] sm:$0xff]
    %v115 = vld [vmem:[%s113 + $0x8] sm:$0xff]
    %v116 = vadd.f32 %v114, %v111
    %v117 = vadd.f32 %v115, %v112
    %118 = vst [vmem:[%s113] sm:$0xff] %v116
    %119 = vst [vmem:[%s113 + $0x8] sm:$0xff] %v117
    %s120 = scalar_lea.vmem [#allocation5], 64
    %v121 = vld [vmem:[%s120] sm:$0xff]
    %v122 = vld [vmem:[%s120 + $0x8] sm:$0xff]
    %v123 = vld [vmem:[%s120 + $0x10] sm:$0xff]
    %v124 = vld [vmem:[%s120 + $0x18] sm:$0xff]
    %v125 = vsub.f32 %v74, %v121
    %v126 = vsub.f32 %v75, %v122
    %v127 = vsub.f32 %v76, %v123
    %v128 = vsub.f32 %v77, %v124
    %v129 = vmul.f32 %v125, %v125
    %v130 = vmul.f32 %v126, %v126
    %v131 = vmul.f32 %v127, %v127
    %v132 = vmul.f32 %v128, %v128
    %v133 = vadd.f32 %v129, %v130
    %v134 = vadd.f32 %v131, %v132
    %s135 = scalar_lea.vmem [#allocation2], 32
    %v136 = vld [vmem:[%s135] sm:$0xff]
    %v137 = vld [vmem:[%s135 + $0x8] sm:$0xff]
    %v138 = vadd.f32 %v136, %v133
    %v139 = vadd.f32 %v137, %v134
    %140 = vst [vmem:[%s135] sm:$0xff] %v138
    %141 = vst [vmem:[%s135 + $0x8] sm:$0xff] %v139
    %v142 = vld [vmem:[#allocation7] sm:$0xff]
    %v143 = vld [vmem:[#allocation7 + $0x8] sm:$0xff]
    %v144 = vld [vmem:[#allocation7 + $0x10] sm:$0xff]
    %v145 = vld [vmem:[#allocation7 + $0x18] sm:$0xff]
    %v146 = vsub.f32 %v74, %v142
    %v147 = vsub.f32 %v75, %v143
    %v148 = vsub.f32 %v76, %v144
    %v149 = vsub.f32 %v77, %v145
    %v150 = vmul.f32 %v146, %v146
    %v151 = vmul.f32 %v147, %v147
    %v152 = vmul.f32 %v148, %v148
    %v153 = vmul.f32 %v149, %v149
    %v154 = vadd.f32 %v150, %v151
    %v155 = vadd.f32 %v152, %v153
    %s156 = scalar_lea.vmem [#allocation2], 48
    %v157 = vld [vmem:[%s156] sm:$0xff]
    %v158 = vld [vmem:[%s156 + $0x8] sm:$0xff]
    %v159 = vadd.f32 %v157, %v154
    %v160 = vadd.f32 %v158, %v155
    %161 = vst [vmem:[%s156] sm:$0xff] %v159
    %162 = vst [vmem:[%s156 + $0x8] sm:$0xff] %v160
    // Predicated region
    $region34: #{tpu_custom_call.1} parent=1 // pred_check
      %p163 = pneg %p58
    $region35: #{tpu_custom_call.1} parent=1 // pred_check_branch
      %165 = sbr.rel (%p163) target = $region37
    $region36: #{tpu_custom_call.1} parent=1 // pred_region
      %v166 = vld [vmem:[%s156] sm:$0xff]
      %v167 = vld [vmem:[%s156 + $0x8] sm:$0xff]
      %168 = vadd.xlane.f32.xlu0 %v166
      %v169 = vpop.xlane.xlu0 %168
      %170 = vadd.xlane.f32.xlu0 %v167
      %v171 = vpop.xlane.xlu0 %170
      %v172 = vrsqrt.pop %v169
      %v173 = vmul.f32 %v169, %v172
      %vm174 = vcmp.eq.f32.partialorder %v169, inf
      %v175 = vsel %vm174, %v169, %v173
      %vm176 = vcmp.eq.f32.partialorder %v169, 0.0
      %v177 = vand.u32 %v169, 2147483648
      %v178 = vsel %vm176, %v177, %v175
      %v179 = vrsqrt.pop %v171
      %v180 = vmul.f32 %v171, %v179
      %vm181 = vcmp.eq.f32.partialorder %v171, inf
      %v182 = vsel %vm181, %v171, %v180
      %vm183 = vcmp.eq.f32.partialorder %v171, 0.0
      %v184 = vand.u32 %v171, 2147483648
      %v185 = vsel %vm183, %v184, %v182
      %v186 = vmul.f32 %v178, 0.5
      %v187 = vmul.f32 %v185, 0.5
      %v188 = vld [vmem:[#allocation2] sm:$0xff]
      %v189 = vld [vmem:[#allocation2 + $0x8] sm:$0xff]
      %190 = vadd.xlane.f32.xlu0 %v188
      %v191 = vpop.xlane.xlu0 %190
      %192 = vadd.xlane.f32.xlu0 %v189
      %v193 = vpop.xlane.xlu0 %192
      %v194 = vrsqrt.pop %v191
      %v195 = vmul.f32 %v191, %v194
      %vm196 = vcmp.eq.f32.partialorder %v191, inf
      %v197 = vsel %vm196, %v191, %v195
      %vm198 = vcmp.eq.f32.partialorder %v191, 0.0
      %v199 = vand.u32 %v191, 2147483648
      %v200 = vsel %vm198, %v199, %v197
      %v201 = vrsqrt.pop %v193
      %v202 = vmul.f32 %v193, %v201
      %vm203 = vcmp.eq.f32.partialorder %v193, inf
      %v204 = vsel %vm203, %v193, %v202
      %vm205 = vcmp.eq.f32.partialorder %v193, 0.0
      %v206 = vand.u32 %v193, 2147483648
      %v207 = vsel %vm205, %v206, %v204
      %v208 = vadd.f32 %v186, %v200
      %v209 = vadd.f32 %v187, %v207
      %v210 = vld [vmem:[%s113] sm:$0xff]
      %v211 = vld [vmem:[%s113 + $0x8] sm:$0xff]
      %212 = vadd.xlane.f32.xlu0 %v210
      %v213 = vpop.xlane.xlu0 %212
      %214 = vadd.xlane.f32.xlu0 %v211
      %v215 = vpop.xlane.xlu0 %214
      %v216 = vrsqrt.pop %v213
      %v217 = vmul.f32 %v213, %v216
      %vm218 = vcmp.eq.f32.partialorder %v213, inf
      %v219 = vsel %vm218, %v213, %v217
      %vm220 = vcmp.eq.f32.partialorder %v213, 0.0
      %v221 = vand.u32 %v213, 2147483648
      %v222 = vsel %vm220, %v221, %v219
      %v223 = vrsqrt.pop %v215
      %v224 = vmul.f32 %v215, %v223
      %vm225 = vcmp.eq.f32.partialorder %v215, inf
      %v226 = vsel %vm225, %v215, %v224
      %vm227 = vcmp.eq.f32.partialorder %v215, 0.0
      %v228 = vand.u32 %v215, 2147483648
      %v229 = vsel %vm227, %v228, %v226
      %v230 = vadd.f32 %v208, %v222
      %v231 = vadd.f32 %v209, %v229
      %v232 = vld [vmem:[%s135] sm:$0xff]
      %v233 = vld [vmem:[%s135 + $0x8] sm:$0xff]
      %234 = vadd.xlane.f32.xlu0 %v232
      %v235 = vpop.xlane.xlu0 %234
      %236 = vadd.xlane.f32.xlu0 %v233
      %v237 = vpop.xlane.xlu0 %236
      %v238 = vrsqrt.pop %v235
      %v239 = vmul.f32 %v235, %v238
      %vm240 = vcmp.eq.f32.partialorder %v235, inf
      %v241 = vsel %vm240, %v235, %v239
      %vm242 = vcmp.eq.f32.partialorder %v235, 0.0
      %v243 = vand.u32 %v235, 2147483648
      %v244 = vsel %vm242, %v243, %v241
      %v245 = vrsqrt.pop %v237
      %v246 = vmul.f32 %v237, %v245
      %vm247 = vcmp.eq.f32.partialorder %v237, inf
      %v248 = vsel %vm247, %v237, %v246
      %vm249 = vcmp.eq.f32.partialorder %v237, 0.0
      %v250 = vand.u32 %v237, 2147483648
      %v251 = vsel %vm249, %v250, %v248
      %v252 = vadd.f32 %v230, %v244
      %v253 = vadd.f32 %v231, %v251
      %v254 = vmul.f32 %v252, 0.0625
      %v255 = vmul.f32 %v253, 0.0625
      %v256 = vld [vmem:[%s3] sm:$0xff]
      %v257 = vld [vmem:[%s3 + $0x8] sm:$0xff]
      %v258 = vsub.f32 1.0, %v256
      %v259 = vsub.f32 1.0, %v257
      %v260 = vmul.f32 %v258, %v254
      %v261 = vmul.f32 %v259, %v255
      %v262 = vmul.f32 %v260, %v254
      %v263 = vmul.f32 %v261, %v255
      %v264 = vmul.f32 %v262, 0.5
      %v265 = vmul.f32 %v263, 0.5
      %v266 = vsub.f32 0.35, %v254
      %v267 = vsub.f32 0.35, %v255
      %v268 = vmax.f32 %v266, 0.0
      %v269 = vmax.f32 %v267, 0.0
      %v270 = vmul.f32 %v268, %v268
      %v271 = vmul.f32 %v269, %v269
      %v272 = vmul.f32 %v256, %v270
      %v273 = vmul.f32 %v257, %v271
      %v274 = vmul.f32 %v272, 0.5
      %v275 = vmul.f32 %v273, 0.5
      %v276 = vadd.f32 %v264, %v274
      %v277 = vadd.f32 %v265, %v275
      %vm278 = vcmask 7168
      %279 = vst.msk [vmem:[%s4] sm:$0xff] %vm278, %v276
      %280 = vst.msk [vmem:[%s4 + $0x8] sm:$0xff] %vm278, %v277
    $region37: #{tpu_custom_call.1} parent=1 // pred_fallthru
      _
    // Predicated region
    $region38: #{tpu_custom_call.1} parent=1 // pred_check
      _
    $region39: #{tpu_custom_call.1} parent=1 // pred_check_branch
      %282 = sbr.rel (0) target = $region41
    $region40: #{tpu_custom_call.1} parent=1 // pred_region
      _
    $region41: #{tpu_custom_call.1} parent=1 // pred_fallthru
      _
    // Predicated region
    $region42: #{tpu_custom_call.1} parent=1 // pred_check
      _
    $region43: #{tpu_custom_call.1} parent=1 // pred_check_branch
      %284 = sbr.rel (0) target = $region45
    $region44: #{tpu_custom_call.1} parent=1 // pred_region
      _
    $region45: #{tpu_custom_call.1} parent=1 // pred_fallthru
      _
    %285 = vsyncpa [#allocation4], 1
    %286 = vsyncpa [#allocation6], 1

</llo_original>
